<compile_context>
chip_gen: v7x
topology: tpu7x:2x2x1
jax: 0.10.0
libtpu: 0.0.40
codegen_flags: <defaults>
</compile_context>

<pallas_src>
import functools

import jax
import jax.numpy as jnp
from jax import lax
from jax.experimental import pallas as pl
from jax.experimental.pallas import tpu as pltpu
from jax.scipy.special import gammaln


_HALF_LOG_2PI = 0.9189385332046727   # 0.5 * log(2*pi)
_SHIFT = 2       # args >= 1 -> Stirling series evaluated at y >= 3 (~1e-6 abs err);
                 # y*den = x(x+1)(x+2) stays in f32 range for evidence up to ~1e12
_NLANES = 128


def _round_up(x, m):
    return ((x + m - 1) // m) * m


def _num_tensorcores():
    """Best-effort TensorCores-per-chip (2 on v7x-style parts, 1 on v5e/v6e)."""
    try:
        info = pltpu.get_tpu_info()
    except Exception:
        return 1
    for attr in ("num_cores", "tensor_cores_per_chip", "cores_per_chip",
                 "num_tensorcores"):
        n = getattr(info, attr, None)
        if isinstance(n, int) and n > 0:
            return n
    return 1


def _recip(x):
    """1/x: one approx EUP vrcp + one Newton step (~f32 accuracy, 1 EUP push)."""
    r = pl.reciprocal(x, approx=True)
    return r * (2.0 - x * r)


def _lgamma_digamma(x, shift=_SHIFT):
    """Fused (lgamma(x), digamma(x)) for x >= max(1, 3 - shift).

    One shared recurrence shift; the per-step logs collapse to a single log of
    the running product and the two divides (1/y for the series, num/den for
    the digamma correction) are merged into one reciprocal of y*den.
    EUP cost: 1 reciprocal + 2 logs per element (1 + 1 when shift == 0).
    """
    num = jnp.zeros_like(x)
    den = jnp.ones_like(x)
    y = x
    for _ in range(shift):
        num = num * y + den          # num/den == sum_k 1/(x+k)
        den = den * y                # den     == prod_k (x+k)
        y = y + 1.0
    if shift == 0:
        inv = _recip(y)
        ratio = None
    else:
        r = _recip(y * den)          # merged divide
        inv = den * r                # 1/y
        ratio = (num * y) * r        # num/den
    inv2 = inv * inv
    log_y = jnp.log(y)
    lg = ((y - 0.5) * log_y - y + _HALF_LOG_2PI
          + inv * (1.0 / 12.0 + inv2 * (-1.0 / 360.0 + inv2 * (1.0 / 1260.0))))
    dg = (log_y - 0.5 * inv
          - inv2 * (1.0 / 12.0 - inv2 * (1.0 / 120.0 - inv2 * (1.0 / 252.0))))
    if shift == 0:
        return lg, dg
    return lg - jnp.log(den), dg - ratio


def _ds_edl_kernel(ev_ref, tgt_ref, prior_ref, acc_ref, *,
                   total_b, tile_b, chunk_b):
    s = pl.program_id(0)                  # "parallel" split (megacore / multi-TC)
    i = pl.program_id(1)                  # "arbitrary" reduction over batch tiles
    tile_base = (s * pl.num_programs(1) + i) * tile_b

    @pl.when(i == 0)
    def _init():
        acc_ref[...] = jnp.zeros_like(acc_ref)

    C = ev_ref.shape[0]
    CH = chunk_b
    n_chunks = tile_b // CH
    n_folds = CH // _NLANES

    prior = prior_ref[...]                                    # (C, 1)
    sum_prior = jnp.sum(prior, axis=0, keepdims=True)         # (1, 1)

    # Chunk-invariant iotas, hoisted (JAX does not CSE broadcasts).
    class_ids = lax.broadcasted_iota(jnp.int32, (C, CH), 0)
    lane_ids = lax.broadcasted_iota(jnp.int32, (1, CH), 1)
    row_ids = lax.broadcasted_iota(jnp.int32, (3, CH), 0)

    a_acc = jnp.zeros((1, CH), jnp.float32)
    kl_acc = jnp.zeros((1, CH), jnp.float32)

    # Static chunk loop: small (C, CH) working sets stay register-resident and
    # consumers are fused right after producers (no full-tile lg/dg temporaries
    # spilled to VMEM), while the large BlockSpec tile amortizes grid overhead.
    for j in range(n_chunks):
        ev = ev_ref[:, j * CH:(j + 1) * CH]                   # (C, CH)
        tgt = tgt_ref[:, j * CH:(j + 1) * CH]                 # (1, CH)

        is_target = class_ids == tgt                          # (C, CH) bool
        alpha = ev + 1.0                                      # (C, CH)
        S = jnp.sum(alpha, axis=0, keepdims=True)             # (1, CH)
        alpha_t = jnp.sum(jnp.where(is_target, alpha, 0.0),
                          axis=0, keepdims=True)              # (1, CH)
        kl_alpha = jnp.where(is_target, 1.0, alpha)           # (C, CH)
        sum_ka = S - alpha_t + 1.0                            # (1, CH)

        # One fused transcendental pipeline for the three (1, CH) rows
        # (S, alpha_target, sum_ka) instead of three 1/8-occupied ones.
        rows = jnp.where(row_ids == 0, S,
                         jnp.where(row_ids == 1, alpha_t, sum_ka))   # (3, CH)
        lg_r, dg_r = _lgamma_digamma(rows)
        a_row = dg_r[0:1, :] - dg_r[1:2, :]        # psi(S) - psi(alpha_target)
        lg_ska = lg_r[2:3, :]
        dg_ska = dg_r[2:3, :]

        lg_ka, dg_ka = _lgamma_digamma(kl_alpha)   # (C, CH)

        # "first" excludes the prior-only constant (added back in the wrapper).
        first = lg_ska - jnp.sum(lg_ka, axis=0, keepdims=True)
        second = (jnp.sum((kl_alpha - prior) * dg_ka, axis=0, keepdims=True)
                  - dg_ska * (sum_ka - sum_prior))
        kl_row = first + second                                # (1, CH)

        # Mask zero-padded batch columns.
        col = lane_ids + (tile_base + j * CH)
        valid = col < total_b
        a_acc = a_acc + jnp.where(valid, a_row, 0.0)
        kl_acc = kl_acc + jnp.where(valid, kl_row, 0.0)

    # Fold CH columns down to 128 lanes with plain VPU adds; the single
    # cross-lane reduce happens once, in the wrapper.
    a128 = a_acc[:, 0:_NLANES]
    kl128 = kl_acc[:, 0:_NLANES]
    for q in range(1, n_folds):
        a128 = a128 + a_acc[:, q * _NLANES:(q + 1) * _NLANES]
        kl128 = kl128 + kl_acc[:, q * _NLANES:(q + 1) * _NLANES]

    acc_ref[0:1, :] += a128
    acc_ref[1:2, :] += kl128


def ds_edl_loss(outputs, targets, alpha_prior, lambda_kl, num_classes=10,
                tile_b=8192, chunk_b=512, n_splits=None):
    """Pallas TPU implementation of DS_EDL_Loss.forward."""
    outputs = outputs.astype(jnp.float32)
    B, C = outputs.shape
    assert C == num_classes

    # Lane-dense layout: (C, B) with batch on the 128-lane axis.
    # TODO(synk): the transpose+pad is an extra HBM round trip over the
    # evidence; produce the EDL head output as (C, B) upstream to remove it.
    ev_t = outputs.T                                           # (C, B)
    tgt = targets.astype(jnp.int32).reshape(1, B)              # (1, B)
    prior_col = jnp.reshape(alpha_prior.astype(jnp.float32), (C, 1))

    chunk_b = max(_NLANES, _round_up(chunk_b, _NLANES))
    max_tile_b = max(chunk_b, _round_up(tile_b, chunk_b))
    if n_splits is None:
        n_splits = _num_tensorcores()
    n_tiles = pl.cdiv(B, max_tile_b)
    n_splits = max(1, min(int(n_splits), n_tiles))
    n_tiles = _round_up(n_tiles, n_splits)
    # Rebalance the tile size so padding overhead stays small.
    tile_b = _round_up(pl.cdiv(B, n_tiles), chunk_b)
    tiles_per_split = n_tiles // n_splits
    b_pad = n_tiles * tile_b

    if b_pad != B:
        ev_t = jnp.pad(ev_t, ((0, 0), (0, b_pad - B)))
        tgt = jnp.pad(tgt, ((0, 0), (0, b_pad - B)))

    kernel = functools.partial(_ds_edl_kernel, total_b=B, tile_b=tile_b,
                               chunk_b=chunk_b)

    def batch_map(s, i):
        return (0, s * tiles_per_split + i)

    parts = pl.pallas_call(
        kernel,
        grid=(n_splits, tiles_per_split),
        in_specs=[
            pl.BlockSpec((C, tile_b), batch_map),              # evidence (C, b_pad)
            pl.BlockSpec((1, tile_b), batch_map),              # targets  (1, b_pad)
            pl.BlockSpec((C, 1), lambda s, i: (0, 0)),         # prior    (C, 1)
        ],
        out_shape=jax.ShapeDtypeStruct((n_splits, 2, _NLANES), jnp.float32),
        # Lane-dense resident accumulator block: row 0 = sum(A), row 1 = sum(KL).
        out_specs=pl.BlockSpec((None, 2, _NLANES), lambda s, i: (s, 0, 0)),
        compiler_params=pltpu.CompilerParams(
            dimension_semantics=("parallel", "arbitrary")),
    )(ev_t, tgt, prior_col)

    # Prior-only KL constant, hoisted out of the kernel.
    prior_flat = jnp.reshape(alpha_prior.astype(jnp.float32), (-1,))
    prior_const = jnp.sum(gammaln(prior_flat)) - gammaln(jnp.sum(prior_flat))

    lam = jnp.asarray(lambda_kl, dtype=jnp.float32)
    a_total = jnp.sum(parts[:, 0, :])
    kl_total = jnp.sum(parts[:, 1, :])
    loss = (a_total + lam * (kl_total + B * prior_const)) / jnp.float32(B)
    return loss


def _ds_edl_loss_ref(outputs, targets, alpha_prior, lambda_kl, num_classes=10):
    """Pure-JAX reference (mirrors the PyTorch module) for validation."""
    from jax.scipy.special import digamma
    one_hot = jax.nn.one_hot(targets, num_classes, dtype=jnp.float32)
    alpha = outputs + 1.0
    S = jnp.sum(alpha, axis=1, keepdims=True)
    A = jnp.sum(one_hot * (digamma(S) - digamma(alpha)), axis=1, keepdims=True)
    kl_alpha = (alpha - 1.0) * (1.0 - one_hot) + 1.0
    ones = alpha_prior
    sum_ka = jnp.sum(kl_alpha, axis=1, keepdims=True)
    first = (gammaln(sum_ka) - jnp.sum(gammaln(kl_alpha), axis=1, keepdims=True)
             + jnp.sum(gammaln(ones), axis=1, keepdims=True)
             - gammaln(jnp.sum(ones, axis=1, keepdims=True)))
    second = jnp.sum((kl_alpha - ones) * (digamma(kl_alpha) - digamma(sum_ka)),
                     axis=1, keepdims=True)
    kl = lambda_kl * (first + second)
    return jnp.mean(A + kl)


if __name__ == "__main__":
    B, C = 8, 10
    key = jax.random.PRNGKey(0)
    k_ev, k_tgt = jax.random.split(key)

    # Non-negative evidence, as produced by an EDL head (e.g. softplus/relu).
    evidence = jax.random.uniform(k_ev, (B, C), dtype=jnp.float32) * 3.0
    targets = jax.random.randint(k_tgt, (B,), 0, C, dtype=jnp.int32)
    alpha_prior = jnp.ones((1, C), dtype=jnp.float32)   # uniform Dirichlet prior
    lambda_kl = 0.5

    loss = ds_edl_loss(evidence, targets, alpha_prior, lambda_kl, num_classes=C)
    loss = jax.block_until_ready(loss)

    ref = _ds_edl_loss_ref(evidence, targets, alpha_prior, lambda_kl, num_classes=C)
    assert jnp.allclose(loss, ref, rtol=1e-3, atol=1e-3), (loss, ref)

    print("KERNEL_OK")
</pallas_src>

<mosaic_0001>
module attributes {stable_mosaic.version = 11 : i64} {
  func.func @_ds_edl_kernel(%arg0: i32, %arg1: i32, %arg2: memref<10x512xf32, #tpu.memory_space<vmem>>, %arg3: memref<1x512xi32, #tpu.memory_space<vmem>>, %arg4: memref<10x1xf32, #tpu.memory_space<vmem>>, %arg5: memref<1x2x128xf32, #tpu.memory_space<vmem>>) attributes {dimension_semantics = [#tpu.dimension_semantics<parallel>, #tpu.dimension_semantics<arbitrary>], iteration_bounds = array<i64: 1, 1>, scalar_prefetch = 0 : i64, scratch_operands = 0 : i64, tpu.core_type = #tpu.core_type<tc>, window_params = [{transform_indices = @transform_0, window_bounds = array<i64: 10, 512>}, {transform_indices = @transform_1, window_bounds = array<i64: 1, 512>}, {pipeline_mode = #tpu.pipeline_mode<synchronous>, transform_indices = @transform_2, window_bounds = array<i64: 10, 1>}, {transform_indices = @transform_3, window_bounds = array<i64: 1, 2, 128>}]} {
    %c1_i32 = arith.constant 1 : i32
    %0 = arith.muli %arg0, %c1_i32 : i32
    %1 = arith.addi %0, %arg1 : i32
    %c512_i32 = arith.constant 512 : i32
    %2 = arith.muli %1, %c512_i32 : i32
    %c0_i32 = arith.constant 0 : i32
    %3 = arith.cmpi eq, %arg1, %c0_i32 : i32
    %4 = arith.extui %3 : i1 to i32
    %c0_i32_0 = arith.constant 0 : i32
    %5 = arith.cmpi ne, %4, %c0_i32_0 : i32
    scf.if %5 {
      %cst_60 = arith.constant 0.000000e+00 : f32
      %204 = vector.broadcast %cst_60 : f32 to vector<2x128xf32>
      %c0_61 = arith.constant 0 : index
      %c0_62 = arith.constant 0 : index
      %c0_63 = arith.constant 0 : index
      %205 = vector.load %arg5[%c0_61, %c0_62, %c0_63] : memref<1x2x128xf32, #tpu.memory_space<vmem>>, vector<1x2x128xf32>
      %206 = vector.shape_cast %205 : vector<1x2x128xf32> to vector<2x128xf32>
      %207 = vector.shape_cast %204 : vector<2x128xf32> to vector<1x2x128xf32>
      tpu.vector_store %arg5[%c0_61, %c0_62, %c0_63], %207 {strides = array<i32>} : memref<1x2x128xf32, #tpu.memory_space<vmem>>, vector<1x2x128xf32>,
    } else {
    }
    %c0 = arith.constant 0 : index
    %c0_1 = arith.constant 0 : index
    %6 = vector.load %arg4[%c0, %c0_1] : memref<10x1xf32, #tpu.memory_space<vmem>>, vector<10x1xf32>
    %cst = arith.constant dense<0.000000e+00> : vector<1xf32>
    %7 = vector.multi_reduction <add>, %6, %cst [0] : vector<10x1xf32> to vector<1xf32>
    %8 = vector.shape_cast %7 : vector<1xf32> to vector<1x1xf32>
    %9 = tpu.iota {dimensions = array<i32: 0>} : vector<10x512xi32>
    %10 = tpu.iota {dimensions = array<i32: 1>} : vector<1x512xi32>
    %11 = tpu.iota {dimensions = array<i32: 0>} : vector<3x512xi32>
    %cst_2 = arith.constant 0.000000e+00 : f32
    %12 = vector.broadcast %cst_2 : f32 to vector<1x512xf32>
    %cst_3 = arith.constant 0.000000e+00 : f32
    %13 = vector.broadcast %cst_3 : f32 to vector<1x512xf32>
    %c0_4 = arith.constant 0 : index
    %c0_5 = arith.constant 0 : index
    %14 = vector.load %arg2[%c0_4, %c0_5] : memref<10x512xf32, #tpu.memory_space<vmem>>, vector<10x512xf32>
    %c0_6 = arith.constant 0 : index
    %c0_7 = arith.constant 0 : index
    %15 = vector.load %arg3[%c0_6, %c0_7] : memref<1x512xi32, #tpu.memory_space<vmem>>, vector<1x512xi32>
    %16 = vector.broadcast %15 : vector<1x512xi32> to vector<10x512xi32>
    %17 = arith.cmpi eq, %9, %16 : vector<10x512xi32>
    %cst_8 = arith.constant 1.000000e+00 : f32
    %18 = vector.broadcast %cst_8 : f32 to vector<10x512xf32>
    %19 = arith.addf %14, %18 : vector<10x512xf32>
    %cst_9 = arith.constant dense<0.000000e+00> : vector<512xf32>
    %20 = vector.multi_reduction <add>, %19, %cst_9 [0] : vector<10x512xf32> to vector<512xf32>
    %21 = vector.shape_cast %20 : vector<512xf32> to vector<1x512xf32>
    %cst_10 = arith.constant 0.000000e+00 : f32
    %22 = vector.broadcast %cst_10 : f32 to vector<10x512xf32>
    %23 = arith.select %17, %19, %22 : vector<10x512xi1>, vector<10x512xf32>
    %cst_11 = arith.constant dense<0.000000e+00> : vector<512xf32>
    %24 = vector.multi_reduction <add>, %23, %cst_11 [0] : vector<10x512xf32> to vector<512xf32>
    %25 = vector.shape_cast %24 : vector<512xf32> to vector<1x512xf32>
    %cst_12 = arith.constant 1.000000e+00 : f32
    %26 = vector.broadcast %cst_12 : f32 to vector<10x512xf32>
    %27 = arith.select %17, %26, %19 : vector<10x512xi1>, vector<10x512xf32>
    %28 = arith.subf %21, %25 : vector<1x512xf32>
    %cst_13 = arith.constant 1.000000e+00 : f32
    %29 = vector.broadcast %cst_13 : f32 to vector<1x512xf32>
    %30 = arith.addf %28, %29 : vector<1x512xf32>
    %c0_i32_14 = arith.constant 0 : i32
    %31 = vector.broadcast %c0_i32_14 : i32 to vector<3x512xi32>
    %32 = arith.cmpi eq, %11, %31 : vector<3x512xi32>
    %c1_i32_15 = arith.constant 1 : i32
    %33 = vector.broadcast %c1_i32_15 : i32 to vector<3x512xi32>
    %34 = arith.cmpi eq, %11, %33 : vector<3x512xi32>
    %35 = vector.shape_cast %25 : vector<1x512xf32> to vector<1x512xf32>
    %36 = vector.broadcast %35 : vector<1x512xf32> to vector<3x512xf32>
    %37 = vector.shape_cast %30 : vector<1x512xf32> to vector<1x512xf32>
    %38 = vector.broadcast %37 : vector<1x512xf32> to vector<3x512xf32>
    %39 = arith.select %34, %36, %38 : vector<3x512xi1>, vector<3x512xf32>
    %40 = vector.shape_cast %21 : vector<1x512xf32> to vector<1x512xf32>
    %41 = vector.broadcast %40 : vector<1x512xf32> to vector<3x512xf32>
    %42 = arith.select %32, %41, %39 : vector<3x512xi1>, vector<3x512xf32>
    %cst_16 = arith.constant 0.000000e+00 : f32
    %43 = vector.broadcast %cst_16 : f32 to vector<3x512xf32>
    %cst_17 = arith.constant 1.000000e+00 : f32
    %44 = vector.broadcast %cst_17 : f32 to vector<3x512xf32>
    %45 = arith.mulf %43, %42 : vector<3x512xf32>
    %46 = arith.addf %45, %44 : vector<3x512xf32>
    %47 = arith.mulf %44, %42 : vector<3x512xf32>
    %cst_18 = arith.constant 1.000000e+00 : f32
    %48 = vector.broadcast %cst_18 : f32 to vector<3x512xf32>
    %49 = arith.addf %42, %48 : vector<3x512xf32>
    %50 = arith.mulf %46, %49 : vector<3x512xf32>
    %51 = arith.addf %50, %47 : vector<3x512xf32>
    %52 = arith.mulf %47, %49 : vector<3x512xf32>
    %cst_19 = arith.constant 1.000000e+00 : f32
    %53 = vector.broadcast %cst_19 : f32 to vector<3x512xf32>
    %54 = arith.addf %49, %53 : vector<3x512xf32>
    %55 = arith.mulf %54, %52 : vector<3x512xf32>
    %56 = tpu.reciprocal %55 {approx = true} : vector<3x512xf32> -> vector<3x512xf32>
    %57 = arith.mulf %55, %56 : vector<3x512xf32>
    %cst_20 = arith.constant 2.000000e+00 : f32
    %58 = vector.broadcast %cst_20 : f32 to vector<3x512xf32>
    %59 = arith.subf %58, %57 : vector<3x512xf32>
    %60 = arith.mulf %56, %59 : vector<3x512xf32>
    %61 = arith.mulf %52, %60 : vector<3x512xf32>
    %62 = arith.mulf %51, %54 : vector<3x512xf32>
    %63 = arith.mulf %62, %60 : vector<3x512xf32>
    %64 = arith.mulf %61, %61 : vector<3x512xf32>
    %65 = math.log %54 : vector<3x512xf32>
    %cst_21 = arith.constant 5.000000e-01 : f32
    %66 = vector.broadcast %cst_21 : f32 to vector<3x512xf32>
    %67 = arith.subf %54, %66 : vector<3x512xf32>
    %68 = arith.mulf %67, %65 : vector<3x512xf32>
    %69 = arith.subf %68, %54 : vector<3x512xf32>
    %cst_22 = arith.constant 0.918938517 : f32
    %70 = vector.broadcast %cst_22 : f32 to vector<3x512xf32>
    %71 = arith.addf %69, %70 : vector<3x512xf32>
    %cst_23 = arith.constant 7.93650805E-4 : f32
    %72 = vector.broadcast %cst_23 : f32 to vector<3x512xf32>
    %73 = arith.mulf %64, %72 : vector<3x512xf32>
    %cst_24 = arith.constant -0.00277777785 : f32
    %74 = vector.broadcast %cst_24 : f32 to vector<3x512xf32>
    %75 = arith.addf %74, %73 : vector<3x512xf32>
    %76 = arith.mulf %64, %75 : vector<3x512xf32>
    %cst_25 = arith.constant 0.0833333358 : f32
    %77 = vector.broadcast %cst_25 : f32 to vector<3x512xf32>
    %78 = arith.addf %77, %76 : vector<3x512xf32>
    %79 = arith.mulf %61, %78 : vector<3x512xf32>
    %80 = arith.addf %71, %79 : vector<3x512xf32>
    %cst_26 = arith.constant 5.000000e-01 : f32
    %81 = vector.broadcast %cst_26 : f32 to vector<3x512xf32>
    %82 = arith.mulf %81, %61 : vector<3x512xf32>
    %83 = arith.subf %65, %82 : vector<3x512xf32>
    %cst_27 = arith.constant 0.0039682542 : f32
    %84 = vector.broadcast %cst_27 : f32 to vector<3x512xf32>
    %85 = arith.mulf %64, %84 : vector<3x512xf32>
    %cst_28 = arith.constant 0.00833333377 : f32
    %86 = vector.broadcast %cst_28 : f32 to vector<3x512xf32>
    %87 = arith.subf %86, %85 : vector<3x512xf32>
    %88 = arith.mulf %64, %87 : vector<3x512xf32>
    %cst_29 = arith.constant 0.0833333358 : f32
    %89 = vector.broadcast %cst_29 : f32 to vector<3x512xf32>
    %90 = arith.subf %89, %88 : vector<3x512xf32>
    %91 = arith.mulf %64, %90 : vector<3x512xf32>
    %92 = arith.subf %83, %91 : vector<3x512xf32>
    %93 = math.log %52 : vector<3x512xf32>
    %94 = arith.subf %80, %93 : vector<3x512xf32>
    %95 = arith.subf %92, %63 : vector<3x512xf32>
    %96 = vector.extract_strided_slice %95 {offsets = [0, 0], sizes = [1, 512], strides = [1, 1]} : vector<3x512xf32> to vector<1x512xf32>
    %97 = vector.extract_strided_slice %95 {offsets = [1, 0], sizes = [1, 512], strides = [1, 1]} : vector<3x512xf32> to vector<1x512xf32>
    %98 = arith.subf %96, %97 : vector<1x512xf32>
    %99 = vector.extract_strided_slice %94 {offsets = [2, 0], sizes = [1, 512], strides = [1, 1]} : vector<3x512xf32> to vector<1x512xf32>
    %100 = vector.extract_strided_slice %95 {offsets = [2, 0], sizes = [1, 512], strides = [1, 1]} : vector<3x512xf32> to vector<1x512xf32>
    %cst_30 = arith.constant 0.000000e+00 : f32
    %101 = vector.broadcast %cst_30 : f32 to vector<10x512xf32>
    %cst_31 = arith.constant 1.000000e+00 : f32
    %102 = vector.broadcast %cst_31 : f32 to vector<10x512xf32>
    %103 = arith.mulf %101, %27 : vector<10x512xf32>
    %104 = arith.addf %103, %102 : vector<10x512xf32>
    %105 = arith.mulf %102, %27 : vector<10x512xf32>
    %cst_32 = arith.constant 1.000000e+00 : f32
    %106 = vector.broadcast %cst_32 : f32 to vector<10x512xf32>
    %107 = arith.addf %27, %106 : vector<10x512xf32>
    %108 = arith.mulf %104, %107 : vector<10x512xf32>
    %109 = arith.addf %108, %105 : vector<10x512xf32>
    %110 = arith.mulf %105, %107 : vector<10x512xf32>
    %cst_33 = arith.constant 1.000000e+00 : f32
    %111 = vector.broadcast %cst_33 : f32 to vector<10x512xf32>
    %112 = arith.addf %107, %111 : vector<10x512xf32>
    %113 = arith.mulf %112, %110 : vector<10x512xf32>
    %114 = tpu.reciprocal %113 {approx = true} : vector<10x512xf32> -> vector<10x512xf32>
    %115 = arith.mulf %113, %114 : vector<10x512xf32>
    %cst_34 = arith.constant 2.000000e+00 : f32
    %116 = vector.broadcast %cst_34 : f32 to vector<10x512xf32>
    %117 = arith.subf %116, %115 : vector<10x512xf32>
    %118 = arith.mulf %114, %117 : vector<10x512xf32>
    %119 = arith.mulf %110, %118 : vector<10x512xf32>
    %120 = arith.mulf %109, %112 : vector<10x512xf32>
    %121 = arith.mulf %120, %118 : vector<10x512xf32>
    %122 = arith.mulf %119, %119 : vector<10x512xf32>
    %123 = math.log %112 : vector<10x512xf32>
    %cst_35 = arith.constant 5.000000e-01 : f32
    %124 = vector.broadcast %cst_35 : f32 to vector<10x512xf32>
    %125 = arith.subf %112, %124 : vector<10x512xf32>
    %126 = arith.mulf %125, %123 : vector<10x512xf32>
    %127 = arith.subf %126, %112 : vector<10x512xf32>
    %cst_36 = arith.constant 0.918938517 : f32
    %128 = vector.broadcast %cst_36 : f32 to vector<10x512xf32>
    %129 = arith.addf %127, %128 : vector<10x512xf32>
    %cst_37 = arith.constant 7.93650805E-4 : f32
    %130 = vector.broadcast %cst_37 : f32 to vector<10x512xf32>
    %131 = arith.mulf %122, %130 : vector<10x512xf32>
    %cst_38 = arith.constant -0.00277777785 : f32
    %132 = vector.broadcast %cst_38 : f32 to vector<10x512xf32>
    %133 = arith.addf %132, %131 : vector<10x512xf32>
    %134 = arith.mulf %122, %133 : vector<10x512xf32>
    %cst_39 = arith.constant 0.0833333358 : f32
    %135 = vector.broadcast %cst_39 : f32 to vector<10x512xf32>
    %136 = arith.addf %135, %134 : vector<10x512xf32>
    %137 = arith.mulf %119, %136 : vector<10x512xf32>
    %138 = arith.addf %129, %137 : vector<10x512xf32>
    %cst_40 = arith.constant 5.000000e-01 : f32
    %139 = vector.broadcast %cst_40 : f32 to vector<10x512xf32>
    %140 = arith.mulf %139, %119 : vector<10x512xf32>
    %141 = arith.subf %123, %140 : vector<10x512xf32>
    %cst_41 = arith.constant 0.0039682542 : f32
    %142 = vector.broadcast %cst_41 : f32 to vector<10x512xf32>
    %143 = arith.mulf %122, %142 : vector<10x512xf32>
    %cst_42 = arith.constant 0.00833333377 : f32
    %144 = vector.broadcast %cst_42 : f32 to vector<10x512xf32>
    %145 = arith.subf %144, %143 : vector<10x512xf32>
    %146 = arith.mulf %122, %145 : vector<10x512xf32>
    %cst_43 = arith.constant 0.0833333358 : f32
    %147 = vector.broadcast %cst_43 : f32 to vector<10x512xf32>
    %148 = arith.subf %147, %146 : vector<10x512xf32>
    %149 = arith.mulf %122, %148 : vector<10x512xf32>
    %150 = arith.subf %141, %149 : vector<10x512xf32>
    %151 = math.log %110 : vector<10x512xf32>
    %152 = arith.subf %138, %151 : vector<10x512xf32>
    %153 = arith.subf %150, %121 : vector<10x512xf32>
    %cst_44 = arith.constant dense<0.000000e+00> : vector<512xf32>
    %154 = vector.multi_reduction <add>, %152, %cst_44 [0] : vector<10x512xf32> to vector<512xf32>
    %155 = vector.shape_cast %154 : vector<512xf32> to vector<1x512xf32>
    %156 = arith.subf %99, %155 : vector<1x512xf32>
    %157 = vector.broadcast %6 : vector<10x1xf32> to vector<10x512xf32>
    %158 = arith.subf %27, %157 : vector<10x512xf32>
    %159 = arith.mulf %158, %153 : vector<10x512xf32>
    %cst_45 = arith.constant dense<0.000000e+00> : vector<512xf32>
    %160 = vector.multi_reduction <add>, %159, %cst_45 [0] : vector<10x512xf32> to vector<512xf32>
    %161 = vector.shape_cast %160 : vector<512xf32> to vector<1x512xf32>
    %162 = vector.broadcast %8 : vector<1x1xf32> to vector<1x512xf32>
    %163 = arith.subf %30, %162 : vector<1x512xf32>
    %164 = arith.mulf %100, %163 : vector<1x512xf32>
    %165 = arith.subf %161, %164 : vector<1x512xf32>
    %166 = arith.addf %156, %165 : vector<1x512xf32>
    %c0_i32_46 = arith.constant 0 : i32
    %167 = arith.addi %2, %c0_i32_46 : i32
    %168 = vector.broadcast %167 : i32 to vector<1x512xi32>
    %169 = arith.addi %10, %168 : vector<1x512xi32>
    %c8_i32 = arith.constant 8 : i32
    %170 = vector.broadcast %c8_i32 : i32 to vector<1x512xi32>
    %171 = arith.cmpi slt, %169, %170 : vector<1x512xi32>
    %cst_47 = arith.constant 0.000000e+00 : f32
    %172 = vector.broadcast %cst_47 : f32 to vector<1x512xf32>
    %173 = arith.select %171, %98, %172 : vector<1x512xi1>, vector<1x512xf32>
    %174 = arith.addf %12, %173 : vector<1x512xf32>
    %cst_48 = arith.constant 0.000000e+00 : f32
    %175 = vector.broadcast %cst_48 : f32 to vector<1x512xf32>
    %176 = arith.select %171, %166, %175 : vector<1x512xi1>, vector<1x512xf32>
    %177 = arith.addf %13, %176 : vector<1x512xf32>
    %178 = vector.extract_strided_slice %174 {offsets = [0, 0], sizes = [1, 128], strides = [1, 1]} : vector<1x512xf32> to vector<1x128xf32>
    %179 = vector.extract_strided_slice %177 {offsets = [0, 0], sizes = [1, 128], strides = [1, 1]} : vector<1x512xf32> to vector<1x128xf32>
    %180 = vector.extract_strided_slice %174 {offsets = [0, 128], sizes = [1, 128], strides = [1, 1]} : vector<1x512xf32> to vector<1x128xf32>
    %181 = arith.addf %178, %180 : vector<1x128xf32>
    %182 = vector.extract_strided_slice %177 {offsets = [0, 128], sizes = [1, 128], strides = [1, 1]} : vector<1x512xf32> to vector<1x128xf32>
    %183 = arith.addf %179, %182 : vector<1x128xf32>
    %184 = vector.extract_strided_slice %174 {offsets = [0, 256], sizes = [1, 128], strides = [1, 1]} : vector<1x512xf32> to vector<1x128xf32>
    %185 = arith.addf %181, %184 : vector<1x128xf32>
    %186 = vector.extract_strided_slice %177 {offsets = [0, 256], sizes = [1, 128], strides = [1, 1]} : vector<1x512xf32> to vector<1x128xf32>
    %187 = arith.addf %183, %186 : vector<1x128xf32>
    %188 = vector.extract_strided_slice %174 {offsets = [0, 384], sizes = [1, 128], strides = [1, 1]} : vector<1x512xf32> to vector<1x128xf32>
    %189 = arith.addf %185, %188 : vector<1x128xf32>
    %190 = vector.extract_strided_slice %177 {offsets = [0, 384], sizes = [1, 128], strides = [1, 1]} : vector<1x512xf32> to vector<1x128xf32>
    %191 = arith.addf %187, %190 : vector<1x128xf32>
    %c0_49 = arith.constant 0 : index
    %c0_50 = arith.constant 0 : index
    %c0_51 = arith.constant 0 : index
    %192 = vector.load %arg5[%c0_49, %c0_50, %c0_51] : memref<1x2x128xf32, #tpu.memory_space<vmem>>, vector<1x1x128xf32>
    %193 = vector.shape_cast %192 : vector<1x1x128xf32> to vector<1x128xf32>
    %194 = arith.addf %193, %189 : vector<1x128xf32>
    %c0_52 = arith.constant 0 : index
    %c0_53 = arith.constant 0 : index
    %c0_54 = arith.constant 0 : index
    %195 = vector.load %arg5[%c0_52, %c0_53, %c0_54] : memref<1x2x128xf32, #tpu.memory_space<vmem>>, vector<1x1x128xf32>
    %196 = vector.shape_cast %195 : vector<1x1x128xf32> to vector<1x128xf32>
    %197 = vector.shape_cast %194 : vector<1x128xf32> to vector<1x1x128xf32>
    tpu.vector_store %arg5[%c0_52, %c0_53, %c0_54], %197 {strides = array<i32>} : memref<1x2x128xf32, #tpu.memory_space<vmem>>, vector<1x1x128xf32>,
    %c0_55 = arith.constant 0 : index
    %c1 = arith.constant 1 : index
    %c0_56 = arith.constant 0 : index
    %198 = vector.load %arg5[%c0_55, %c1, %c0_56] : memref<1x2x128xf32, #tpu.memory_space<vmem>>, vector<1x1x128xf32>
    %199 = vector.shape_cast %198 : vector<1x1x128xf32> to vector<1x128xf32>
    %200 = arith.addf %199, %191 : vector<1x128xf32>
    %c0_57 = arith.constant 0 : index
    %c1_58 = arith.constant 1 : index
    %c0_59 = arith.constant 0 : index
    %201 = vector.load %arg5[%c0_57, %c1_58, %c0_59] : memref<1x2x128xf32, #tpu.memory_space<vmem>>, vector<1x1x128xf32>
    %202 = vector.shape_cast %201 : vector<1x1x128xf32> to vector<1x128xf32>
    %203 = vector.shape_cast %200 : vector<1x128xf32> to vector<1x1x128xf32>
    tpu.vector_store %arg5[%c0_57, %c1_58, %c0_59], %203 {strides = array<i32>} : memref<1x2x128xf32, #tpu.memory_space<vmem>>, vector<1x1x128xf32>,
    return
  }
  func.func @transform_0(%arg0: i32, %arg1: i32) -> (i32, i32) {
    %c1_i32 = arith.constant 1 : i32
    %0 = arith.muli %arg0, %c1_i32 : i32
    %1 = arith.addi %0, %arg1 : i32
    %c0_i32 = arith.constant 0 : i32
    %c0_i32_0 = arith.constant 0 : i32
    return %c0_i32, %1 : i32, i32
  }
  func.func @transform_1(%arg0: i32, %arg1: i32) -> (i32, i32) {
    %c1_i32 = arith.constant 1 : i32
    %0 = arith.muli %arg0, %c1_i32 : i32
    %1 = arith.addi %0, %arg1 : i32
    %c0_i32 = arith.constant 0 : i32
    %c0_i32_0 = arith.constant 0 : i32
    return %c0_i32, %1 : i32, i32
  }
  func.func @transform_2(%arg0: i32, %arg1: i32) -> (i32, i32) {
    %c0_i32 = arith.constant 0 : i32
    %c0_i32_0 = arith.constant 0 : i32
    %c0_i32_1 = arith.constant 0 : i32
    return %c0_i32, %c0_i32_0 : i32, i32
  }
  func.func @transform_3(%arg0: i32, %arg1: i32) -> (i32, i32, i32) {
    %c0_i32 = arith.constant 0 : i32
    %c0_i32_0 = arith.constant 0 : i32
    %c0_i32_1 = arith.constant 0 : i32
    return %arg0, %c0_i32, %c0_i32_0 : i32, i32, i32
  }
}

</mosaic_0001>

<llo_original>
// kernel: tpu_custom_call.1
$region0: #{tpu_custom_call.1}
  #allocation0 [shape = 'u32[]', space=smem, size = 0x4, offset = 0x4, fixed_abs, tag = 'smem constant byte address 0x4 - core index']
  #allocation1 [shape = 'u32[144,128]{1,0:T(1,128)}', space=vmem, size = 0x12000, scoped, tag = 'internal scratch']
  %s0 = inlined_call_operand.hbm [shape: f32[10,512], index: 0, kind: input, shape index: {}]
  %s1 = inlined_call_operand.vmem [shape: s32[1,512], index: 1, kind: input, shape index: {}]
  %s2 = inlined_call_operand.vmem [shape: f32[10,1], index: 2, kind: input, shape index: {}]
  %s3 = inlined_call_operand.hbm [shape: f32[1,2,128], index: 3, kind: output, shape index: {}]
  %s4 = sld [smem:[#allocation0]]
  $region30: #{tpu_custom_call.1} parent=0
    _
  %s6 = ssub.s32 1, %s4
  %s7 = scalar_select 0, %s6, %s4
  $region1: #{tpu_custom_call.1} parent=0
    #allocation2 [shape = 'u8[32768]{0}', space=vmem, size = 0x8000, scoped, tag = 'input window, operand 0, single buffered']
    #allocation3 [shape = 's32[1]{0}', space=sflag, size = 0x4, scoped, tag = 'scoped memory for tpu_custom_call.1']
    #allocation4 [shape = 's32[1]{0}', space=sflag, size = 0x4, scoped, tag = 'scoped memory for tpu_custom_call.1']
    #allocation5 [shape = 'u8[1024]{0}', space=vmem, size = 0x400, scoped, tag = 'output window, operand 0, single buffered']
    %8 = vsyncpa [#allocation3], 0
    %9 = vsyncpa [#allocation4], 0
    // Predicated region
    $region2: #{tpu_custom_call.1} parent=1 // pred_check
      _
    $region3: #{tpu_custom_call.1} parent=1 // pred_check_branch
      %11 = sbr.rel (0) target = $region5
    $region4: #{tpu_custom_call.1} parent=1 // pred_region
      %s12 = sadd.s32 0, 0
      %s13 = smul.u32 4, %s12
      %s15 = ssub.s32 1024, 1024
      %16 = vsyncadd [#allocation3], %s15
      %s17 = smul.addr %s13, 128
      %s18 = scalar_lea.hbm %s0, %s17
      %s19 = sshll.u32 [#allocation2], 4
      %s20 = int_to_ptr.vmem [resolvable:$true] %s19
      %25 = dma.hbm_to_vmem [thread:$0]  %s18, 1024, %s20, [#allocation3], 512, 512, 32
    $region5: #{tpu_custom_call.1} parent=1 // pred_fallthru
      _
    // Predicated region
    $region6: #{tpu_custom_call.1} parent=1 // pred_check
      _
    $region7: #{tpu_custom_call.1} parent=1 // pred_check_branch
      %27 = sbr.rel (0) target = $region9
    $region8: #{tpu_custom_call.1} parent=1 // pred_region
      %s28 = sadd.s32 0, 0
      %s29 = smul.u32 4, %s28
      %p30 = scmp.lt.s32.totalorder %s29, 3
      %s31 = scalar_select %p30, %s29, 3
      %s32 = scalar_lea.vmem %s1, %s31
      %s33 = sadd.s32 0, 0
      %s34 = smul.u32 4, %s33
    $region9: #{tpu_custom_call.1} parent=1 // pred_fallthru
      _
    // Predicated region
    $region10: #{tpu_custom_call.1} parent=1 // pred_check
      _
    $region11: #{tpu_custom_call.1} parent=1 // pred_check_branch
      %36 = sbr.rel (0) target = $region13
    $region12: #{tpu_custom_call.1} parent=1 // pred_region
      _
    $region13: #{tpu_custom_call.1} parent=1 // pred_fallthru
      _
    // Predicated region
    $region14: #{tpu_custom_call.1} parent=1 // pred_check
      _
    $region15: #{tpu_custom_call.1} parent=1 // pred_check_branch
      %38 = sbr.rel (0) target = $region17
    $region16: #{tpu_custom_call.1} parent=1 // pred_region
      %39 = dma.done [#allocation3], 1024
    $region17: #{tpu_custom_call.1} parent=1 // pred_fallthru
      _
    %s40 = sadd.s32 0, 0
    %s41 = smul.u32 4, %s40
    %p42 = scmp.lt.s32.totalorder %s41, 3
    %s43 = scalar_select %p42, %s41, 3
    %s44 = scalar_lea.vmem %s1, %s43
    %s45 = sadd.s32 0, 0
    %s46 = smul.u32 4, %s45
    %s47 = sadd.s32 0, 0
    %s48 = smul.u32 4, %s47
    %p49 = scmp.lt.s32.totalorder %s48, 3
    %s50 = scalar_select %p49, %s48, 3
    %s51 = scalar_lea.vmem %s1, %s50
    %s52 = sadd.s32 0, 0
    %s53 = smul.u32 4, %s52
    %s54 = sadd.s32 0, 0
    %s55 = smul.u32 %s54, 512
    %p56 = scmp.eq.s32.totalorder 0, 0
    // Predicated region
    $region18: #{tpu_custom_call.1} parent=1 // pred_check
      %p57 = pneg %p56
    $region19: #{tpu_custom_call.1} parent=1 // pred_check_branch
      %59 = sbr.rel (%p57) target = $region21
    $region20: #{tpu_custom_call.1} parent=1 // pred_region
      %60 = vst [vmem:[#allocation5] sm:$0x3] 0.0
    $region21: #{tpu_custom_call.1} parent=1 // pred_fallthru
      _
    %v61 = vld [vmem:[%s2] sm:$0xff]
    %v62 = vld [vmem:[%s2 + $0x8] sm:$0x3]
    %vm63 = vcmask 7168
    %v64 = vsel %vm63, %v61, 0.0
    %vm65 = vcmask 1024
    %v66 = vsel %vm65, %v62, 0.0
    %v67 = vadd.f32 %v64, %v66
    %v68 = vrot.slane %v67, 4
    %v69 = vadd.f32 %v67, %v68
    %v70 = vrot.slane %v69, 2
    %v71 = vadd.f32 %v69, %v70
    %v72 = vrot.slane %v71, 1
    %v73 = vadd.f32 %v71, %v72
    %v74 = vlaneseq
    %v75 = vshrl.u32 %v74, 7
    %v76 = vadd.s32 %v75, 8
    %v77 = vlaneseq
    %v78 = vand.u32 %v77, 127
    %v79 = vadd.s32 %v78, 128
    %v80 = vadd.s32 %v78, 256
    %v81 = vadd.s32 %v78, 384
    %v82 = vld [vmem:[#allocation2] sm:$0xff]
    %v83 = vld [vmem:[#allocation2 + $0x8] sm:$0xff]
    %v84 = vld [vmem:[#allocation2 + $0x10] sm:$0xff]
    %v85 = vld [vmem:[#allocation2 + $0x18] sm:$0xff]
    %v86 = vld [vmem:[#allocation2 + $0x20] sm:$0x3]
    %v87 = vld [vmem:[#allocation2 + $0x28] sm:$0x3]
    %v88 = vld [vmem:[#allocation2 + $0x30] sm:$0x3]
    %v89 = vld [vmem:[#allocation2 + $0x38] sm:$0x3]
    %v90 = vld [vmem:[%s51] sm:$0xf]
    %v91 = vlaneseq
    %v92 = vshrl.u32 %v91, 7
    %v93 = vsub.s32 0, %v92
    %v94 = vrot.slane %v90, %v93
    %v95 = vlaneseq
    %v96 = vshrl.u32 %v95, 7
    %v97 = vsub.s32 1, %v96
    %v98 = vrot.slane %v90, %v97
    %v99 = vlaneseq
    %v100 = vshrl.u32 %v99, 7
    %v101 = vsub.s32 2, %v100
    %v102 = vrot.slane %v90, %v101
    %v103 = vlaneseq
    %v104 = vshrl.u32 %v103, 7
    %v105 = vsub.s32 3, %v104
    %v106 = vrot.slane %v90, %v105
    %vm107 = vcmp.eq.s32.totalorder %v75, %v94
    %vm108 = vcmp.eq.s32.totalorder %v75, %v98
    %vm109 = vcmp.eq.s32.totalorder %v75, %v102
    %vm110 = vcmp.eq.s32.totalorder %v75, %v106
    %vm111 = vcmp.eq.s32.totalorder %v76, %v94
    %vm112 = vcmp.eq.s32.totalorder %v76, %v98
    %vm113 = vcmp.eq.s32.totalorder %v76, %v102
    %vm114 = vcmp.eq.s32.totalorder %v76, %v106
    %v115 = vadd.f32 %v82, 1.0
    %v116 = vadd.f32 %v83, 1.0
    %v117 = vadd.f32 %v84, 1.0
    %v118 = vadd.f32 %v85, 1.0
    %v119 = vadd.f32 %v86, 1.0
    %v120 = vadd.f32 %v87, 1.0
    %v121 = vadd.f32 %v88, 1.0
    %v122 = vadd.f32 %v89, 1.0
    %vm123 = vcmask 1041408
    %v124 = vsel %vm123, %v119, 0.0
    %v125 = vadd.f32 %v115, %v124
    %v126 = vrot.slane %v125, 4
    %v127 = vadd.f32 %v125, %v126
    %v128 = vrot.slane %v127, 2
    %v129 = vadd.f32 %v127, %v128
    %v130 = vrot.slane %v129, 1
    %v131 = vadd.f32 %v129, %v130
    %v132 = vsel %vm123, %v120, 0.0
    %v133 = vadd.f32 %v116, %v132
    %v134 = vrot.slane %v133, 4
    %v135 = vadd.f32 %v133, %v134
    %v136 = vrot.slane %v135, 2
    %v137 = vadd.f32 %v135, %v136
    %v138 = vrot.slane %v137, 1
    %v139 = vadd.f32 %v137, %v138
    %v140 = vsel %vm123, %v121, 0.0
    %v141 = vadd.f32 %v117, %v140
    %v142 = vrot.slane %v141, 4
    %v143 = vadd.f32 %v141, %v142
    %v144 = vrot.slane %v143, 2
    %v145 = vadd.f32 %v143, %v144
    %v146 = vrot.slane %v145, 1
    %v147 = vadd.f32 %v145, %v146
    %v148 = vsel %vm123, %v122, 0.0
    %v149 = vadd.f32 %v118, %v148
    %v150 = vrot.slane %v149, 4
    %v151 = vadd.f32 %v149, %v150
    %v152 = vrot.slane %v151, 2
    %v153 = vadd.f32 %v151, %v152
    %v154 = vrot.slane %v153, 1
    %v155 = vadd.f32 %v153, %v154
    %v156 = vsel %vm107, %v115, 0.0
    %v157 = vsel %vm108, %v116, 0.0
    %v158 = vsel %vm109, %v117, 0.0
    %v159 = vsel %vm110, %v118, 0.0
    %v160 = vsel %vm111, %v119, 0.0
    %v161 = vsel %vm112, %v120, 0.0
    %v162 = vsel %vm113, %v121, 0.0
    %v163 = vsel %vm114, %v122, 0.0
    %v164 = vsel %vm123, %v160, 0.0
    %v165 = vadd.f32 %v156, %v164
    %v166 = vrot.slane %v165, 4
    %v167 = vadd.f32 %v165, %v166
    %v168 = vrot.slane %v167, 2
    %v169 = vadd.f32 %v167, %v168
    %v170 = vrot.slane %v169, 1
    %v171 = vadd.f32 %v169, %v170
    %v172 = vsel %vm123, %v161, 0.0
    %v173 = vadd.f32 %v157, %v172
    %v174 = vrot.slane %v173, 4
    %v175 = vadd.f32 %v173, %v174
    %v176 = vrot.slane %v175, 2
    %v177 = vadd.f32 %v175, %v176
    %v178 = vrot.slane %v177, 1
    %v179 = vadd.f32 %v177, %v178
    %v180 = vsel %vm123, %v162, 0.0
    %v181 = vadd.f32 %v158, %v180
    %v182 = vrot.slane %v181, 4
    %v183 = vadd.f32 %v181, %v182
    %v184 = vrot.slane %v183, 2
    %v185 = vadd.f32 %v183, %v184
    %v186 = vrot.slane %v185, 1
    %v187 = vadd.f32 %v185, %v186
    %v188 = vsel %vm123, %v163, 0.0
    %v189 = vadd.f32 %v159, %v188
    %v190 = vrot.slane %v189, 4
    %v191 = vadd.f32 %v189, %v190
    %v192 = vrot.slane %v191, 2
    %v193 = vadd.f32 %v191, %v192
    %v194 = vrot.slane %v193, 1
    %v195 = vadd.f32 %v193, %v194
    %v196 = vsel %vm107, 1.0, %v115
    %v197 = vsel %vm108, 1.0, %v116
    %v198 = vsel %vm109, 1.0, %v117
    %v199 = vsel %vm110, 1.0, %v118
    %v200 = vsel %vm111, 1.0, %v119
    %v201 = vsel %vm112, 1.0, %v120
    %v202 = vsel %vm113, 1.0, %v121
    %v203 = vsel %vm114, 1.0, %v122
    %v204 = vsub.f32 %v131, %v171
    %v205 = vsub.f32 %v139, %v179
    %v206 = vsub.f32 %v147, %v187
    %v207 = vsub.f32 %v155, %v195
    %v208 = vadd.f32 %v204, 1.0
    %v209 = vadd.f32 %v205, 1.0
    %v210 = vadd.f32 %v206, 1.0
    %v211 = vadd.f32 %v207, 1.0
    %vm212 = vcmp.eq.s32.totalorder %v75, 0
    %vm213 = vcmp.eq.s32.totalorder %v75, 1
    %v214 = vsel %vm213, %v171, %v208
    %v215 = vsel %vm213, %v179, %v209
    %v216 = vsel %vm213, %v187, %v210
    %v217 = vsel %vm213, %v195, %v211
    %v218 = vsel %vm212, %v131, %v214
    %v219 = vsel %vm212, %v139, %v215
    %v220 = vsel %vm212, %v147, %v216
    %v221 = vsel %vm212, %v155, %v217
    %v222 = vmul.f32 %v218, 0.0
    %v223 = vmul.f32 %v219, 0.0
    %v224 = vmul.f32 %v220, 0.0
    %v225 = vmul.f32 %v221, 0.0
    %v226 = vadd.f32 %v222, 1.0
    %v227 = vadd.f32 %v223, 1.0
    %v228 = vadd.f32 %v224, 1.0
    %v229 = vadd.f32 %v225, 1.0
    %v230 = vadd.f32 %v218, 1.0
    %v231 = vadd.f32 %v219, 1.0
    %v232 = vadd.f32 %v220, 1.0
    %v233 = vadd.f32 %v221, 1.0
    %v234 = vmul.f32 %v226, %v230
    %v235 = vmul.f32 %v227, %v231
    %v236 = vmul.f32 %v228, %v232
    %v237 = vmul.f32 %v229, %v233
    %v238 = vadd.f32 %v234, %v218
    %v239 = vadd.f32 %v235, %v219
    %v240 = vadd.f32 %v236, %v220
    %v241 = vadd.f32 %v237, %v221
    %v242 = vmul.f32 %v218, %v230
    %v243 = vmul.f32 %v219, %v231
    %v244 = vmul.f32 %v220, %v232
    %v245 = vmul.f32 %v221, %v233
    %v246 = vadd.f32 %v230, 1.0
    %v247 = vadd.f32 %v231, 1.0
    %v248 = vadd.f32 %v232, 1.0
    %v249 = vadd.f32 %v233, 1.0
    %v250 = vmul.f32 %v246, %v242
    %v251 = vmul.f32 %v247, %v243
    %v252 = vmul.f32 %v248, %v244
    %v253 = vmul.f32 %v249, %v245
    %v254 = vrcp.pop %v250
    %v255 = vrcp.pop %v251
    %v256 = vrcp.pop %v252
    %v257 = vrcp.pop %v253
    %v258 = vmul.f32 %v250, %v254
    %v259 = vmul.f32 %v251, %v255
    %v260 = vmul.f32 %v252, %v256
    %v261 = vmul.f32 %v253, %v257
    %v262 = vsub.f32 2.0, %v258
    %v263 = vsub.f32 2.0, %v259
    %v264 = vsub.f32 2.0, %v260
    %v265 = vsub.f32 2.0, %v261
    %v266 = vmul.f32 %v254, %v262
    %v267 = vmul.f32 %v255, %v263
    %v268 = vmul.f32 %v256, %v264
    %v269 = vmul.f32 %v257, %v265
    %v270 = vmul.f32 %v242, %v266
    %v271 = vmul.f32 %v243, %v267
    %v272 = vmul.f32 %v244, %v268
    %v273 = vmul.f32 %v245, %v269
    %v274 = vmul.f32 %v238, %v246
    %v275 = vmul.f32 %v239, %v247
    %v276 = vmul.f32 %v240, %v248
    %v277 = vmul.f32 %v241, %v249
    %v278 = vmul.f32 %v274, %v266
    %v279 = vmul.f32 %v275, %v267
    %v280 = vmul.f32 %v276, %v268
    %v281 = vmul.f32 %v277, %v269
    %v282 = vmul.f32 %v270, %v270
    %v283 = vmul.f32 %v271, %v271
    %v284 = vmul.f32 %v272, %v272
    %v285 = vmul.f32 %v273, %v273
    %v286 = vlog2.pop %v246
    %v287 = vmul.f32 %v286, 0.6931472
    %v288 = vlog2.pop %v247
    %v289 = vmul.f32 %v288, 0.6931472
    %v290 = vlog2.pop %v248
    %v291 = vmul.f32 %v290, 0.6931472
    %v292 = vlog2.pop %v249
    %v293 = vmul.f32 %v292, 0.6931472
    %v294 = vsub.f32 %v246, 0.5
    %v295 = vsub.f32 %v247, 0.5
    %v296 = vsub.f32 %v248, 0.5
    %v297 = vsub.f32 %v249, 0.5
    %v298 = vmul.f32 %v294, %v287
    %v299 = vmul.f32 %v295, %v289
    %v300 = vmul.f32 %v296, %v291
    %v301 = vmul.f32 %v297, %v293
    %v302 = vsub.f32 %v298, %v246
    %v303 = vsub.f32 %v299, %v247
    %v304 = vsub.f32 %v300, %v248
    %v305 = vsub.f32 %v301, %v249
    %v306 = vadd.f32 %v302, 0.9189385
    %v307 = vadd.f32 %v303, 0.9189385
    %v308 = vadd.f32 %v304, 0.9189385
    %v309 = vadd.f32 %v305, 0.9189385
    %v310 = vmul.f32 %v282, 0.0007936508
    %v311 = vmul.f32 %v283, 0.0007936508
    %v312 = vmul.f32 %v284, 0.0007936508
    %v313 = vmul.f32 %v285, 0.0007936508
    %v314 = vadd.f32 %v310, -0.0027777778
    %v315 = vadd.f32 %v311, -0.0027777778
    %v316 = vadd.f32 %v312, -0.0027777778
    %v317 = vadd.f32 %v313, -0.0027777778
    %v318 = vmul.f32 %v282, %v314
    %v319 = vmul.f32 %v283, %v315
    %v320 = vmul.f32 %v284, %v316
    %v321 = vmul.f32 %v285, %v317
    %v322 = vadd.f32 %v318, 0.083333336
    %v323 = vadd.f32 %v319, 0.083333336
    %v324 = vadd.f32 %v320, 0.083333336
    %v325 = vadd.f32 %v321, 0.083333336
    %v326 = vmul.f32 %v270, %v322
    %v327 = vmul.f32 %v271, %v323
    %v328 = vmul.f32 %v272, %v324
    %v329 = vmul.f32 %v273, %v325
    %v330 = vadd.f32 %v306, %v326
    %v331 = vadd.f32 %v307, %v327
    %v332 = vadd.f32 %v308, %v328
    %v333 = vadd.f32 %v309, %v329
    %v334 = vmul.f32 %v270, 0.5
    %v335 = vmul.f32 %v271, 0.5
    %v336 = vmul.f32 %v272, 0.5
    %v337 = vmul.f32 %v273, 0.5
    %v338 = vsub.f32 %v287, %v334
    %v339 = vsub.f32 %v289, %v335
    %v340 = vsub.f32 %v291, %v336
    %v341 = vsub.f32 %v293, %v337
    %v342 = vmul.f32 %v282, 0.003968254
    %v343 = vmul.f32 %v283, 0.003968254
    %v344 = vmul.f32 %v284, 0.003968254
    %v345 = vmul.f32 %v285, 0.003968254
    %v346 = vsub.f32 0.008333334, %v342
    %v347 = vsub.f32 0.008333334, %v343
    %v348 = vsub.f32 0.008333334, %v344
    %v349 = vsub.f32 0.008333334, %v345
    %v350 = vmul.f32 %v282, %v346
    %v351 = vmul.f32 %v283, %v347
    %v352 = vmul.f32 %v284, %v348
    %v353 = vmul.f32 %v285, %v349
    %v354 = vsub.f32 0.083333336, %v350
    %v355 = vsub.f32 0.083333336, %v351
    %v356 = vsub.f32 0.083333336, %v352
    %v357 = vsub.f32 0.083333336, %v353
    %v358 = vmul.f32 %v282, %v354
    %v359 = vmul.f32 %v283, %v355
    %v360 = vmul.f32 %v284, %v356
    %v361 = vmul.f32 %v285, %v357
    %v362 = vsub.f32 %v338, %v358
    %v363 = vsub.f32 %v339, %v359
    %v364 = vsub.f32 %v340, %v360
    %v365 = vsub.f32 %v341, %v361
    %v366 = vlog2.pop %v242
    %v367 = vmul.f32 %v366, 0.6931472
    %v368 = vlog2.pop %v243
    %v369 = vmul.f32 %v368, 0.6931472
    %v370 = vlog2.pop %v244
    %v371 = vmul.f32 %v370, 0.6931472
    %v372 = vlog2.pop %v245
    %v373 = vmul.f32 %v372, 0.6931472
    %v374 = vsub.f32 %v330, %v367
    %v375 = vsub.f32 %v331, %v369
    %v376 = vsub.f32 %v332, %v371
    %v377 = vsub.f32 %v333, %v373
    %v378 = vsub.f32 %v362, %v278
    %v379 = vsub.f32 %v363, %v279
    %v380 = vsub.f32 %v364, %v280
    %v381 = vsub.f32 %v365, %v281
    %v386 = vrot.slane %v378, 1
    %v387 = vrot.slane %v379, 1
    %v388 = vrot.slane %v380, 1
    %v389 = vrot.slane %v381, 1
    %v394 = vsub.f32 %v378, %v386
    %v395 = vsub.f32 %v379, %v387
    %v396 = vsub.f32 %v380, %v388
    %v397 = vsub.f32 %v381, %v389
    %v398 = vmul.f32 %v196, 0.0
    %v399 = vmul.f32 %v197, 0.0
    %v400 = vmul.f32 %v198, 0.0
    %v401 = vmul.f32 %v199, 0.0
    %v402 = vmul.f32 %v200, 0.0
    %v403 = vmul.f32 %v201, 0.0
    %v404 = vmul.f32 %v202, 0.0
    %v405 = vmul.f32 %v203, 0.0
    %v406 = vadd.f32 %v398, 1.0
    %v407 = vadd.f32 %v399, 1.0
    %v408 = vadd.f32 %v400, 1.0
    %v409 = vadd.f32 %v401, 1.0
    %v410 = vadd.f32 %v402, 1.0
    %v411 = vadd.f32 %v403, 1.0
    %v412 = vadd.f32 %v404, 1.0
    %v413 = vadd.f32 %v405, 1.0
    %v414 = vadd.f32 %v196, 1.0
    %v415 = vadd.f32 %v197, 1.0
    %v416 = vadd.f32 %v198, 1.0
    %v417 = vadd.f32 %v199, 1.0
    %v418 = vadd.f32 %v200, 1.0
    %v419 = vadd.f32 %v201, 1.0
    %v420 = vadd.f32 %v202, 1.0
    %v421 = vadd.f32 %v203, 1.0
    %v422 = vmul.f32 %v406, %v414
    %v423 = vmul.f32 %v407, %v415
    %v424 = vmul.f32 %v408, %v416
    %v425 = vmul.f32 %v409, %v417
    %v426 = vmul.f32 %v410, %v418
    %v427 = vmul.f32 %v411, %v419
    %v428 = vmul.f32 %v412, %v420
    %v429 = vmul.f32 %v413, %v421
    %v430 = vadd.f32 %v422, %v196
    %v431 = vadd.f32 %v423, %v197
    %v432 = vadd.f32 %v424, %v198
    %v433 = vadd.f32 %v425, %v199
    %v434 = vadd.f32 %v426, %v200
    %v435 = vadd.f32 %v427, %v201
    %v436 = vadd.f32 %v428, %v202
    %v437 = vadd.f32 %v429, %v203
    %v438 = vmul.f32 %v196, %v414
    %v439 = vmul.f32 %v197, %v415
    %v440 = vmul.f32 %v198, %v416
    %v441 = vmul.f32 %v199, %v417
    %v442 = vmul.f32 %v200, %v418
    %v443 = vmul.f32 %v201, %v419
    %v444 = vmul.f32 %v202, %v420
    %v445 = vmul.f32 %v203, %v421
    %v446 = vadd.f32 %v414, 1.0
    %v447 = vadd.f32 %v415, 1.0
    %v448 = vadd.f32 %v416, 1.0
    %v449 = vadd.f32 %v417, 1.0
    %v450 = vadd.f32 %v418, 1.0
    %v451 = vadd.f32 %v419, 1.0
    %v452 = vadd.f32 %v420, 1.0
    %v453 = vadd.f32 %v421, 1.0
    %v454 = vmul.f32 %v446, %v438
    %v455 = vmul.f32 %v447, %v439
    %v456 = vmul.f32 %v448, %v440
    %v457 = vmul.f32 %v449, %v441
    %v458 = vmul.f32 %v450, %v442
    %v459 = vmul.f32 %v451, %v443
    %v460 = vmul.f32 %v452, %v444
    %v461 = vmul.f32 %v453, %v445
    %v462 = vrcp.pop %v454
    %v463 = vrcp.pop %v455
    %v464 = vrcp.pop %v456
    %v465 = vrcp.pop %v457
    %v466 = vrcp.pop %v458
    %v467 = vrcp.pop %v459
    %v468 = vrcp.pop %v460
    %v469 = vrcp.pop %v461
    %v470 = vmul.f32 %v454, %v462
    %v471 = vmul.f32 %v455, %v463
    %v472 = vmul.f32 %v456, %v464
    %v473 = vmul.f32 %v457, %v465
    %v474 = vmul.f32 %v458, %v466
    %v475 = vmul.f32 %v459, %v467
    %v476 = vmul.f32 %v460, %v468
    %v477 = vmul.f32 %v461, %v469
    %v478 = vsub.f32 2.0, %v470
    %v479 = vsub.f32 2.0, %v471
    %v480 = vsub.f32 2.0, %v472
    %v481 = vsub.f32 2.0, %v473
    %v482 = vsub.f32 2.0, %v474
    %v483 = vsub.f32 2.0, %v475
    %v484 = vsub.f32 2.0, %v476
    %v485 = vsub.f32 2.0, %v477
    %v486 = vmul.f32 %v462, %v478
    %v487 = vmul.f32 %v463, %v479
    %v488 = vmul.f32 %v464, %v480
    %v489 = vmul.f32 %v465, %v481
    %v490 = vmul.f32 %v466, %v482
    %v491 = vmul.f32 %v467, %v483
    %v492 = vmul.f32 %v468, %v484
    %v493 = vmul.f32 %v469, %v485
    %v494 = vmul.f32 %v438, %v486
    %v495 = vmul.f32 %v439, %v487
    %v496 = vmul.f32 %v440, %v488
    %v497 = vmul.f32 %v441, %v489
    %v498 = vmul.f32 %v442, %v490
    %v499 = vmul.f32 %v443, %v491
    %v500 = vmul.f32 %v444, %v492
    %v501 = vmul.f32 %v445, %v493
    %v502 = vmul.f32 %v430, %v446
    %v503 = vmul.f32 %v431, %v447
    %v504 = vmul.f32 %v432, %v448
    %v505 = vmul.f32 %v433, %v449
    %v506 = vmul.f32 %v434, %v450
    %v507 = vmul.f32 %v435, %v451
    %v508 = vmul.f32 %v436, %v452
    %v509 = vmul.f32 %v437, %v453
    %v510 = vmul.f32 %v502, %v486
    %v511 = vmul.f32 %v503, %v487
    %v512 = vmul.f32 %v504, %v488
    %v513 = vmul.f32 %v505, %v489
    %v514 = vmul.f32 %v506, %v490
    %v515 = vmul.f32 %v507, %v491
    %v516 = vmul.f32 %v508, %v492
    %v517 = vmul.f32 %v509, %v493
    %v518 = vmul.f32 %v494, %v494
    %v519 = vmul.f32 %v495, %v495
    %v520 = vmul.f32 %v496, %v496
    %v521 = vmul.f32 %v497, %v497
    %v522 = vmul.f32 %v498, %v498
    %v523 = vmul.f32 %v499, %v499
    %v524 = vmul.f32 %v500, %v500
    %v525 = vmul.f32 %v501, %v501
    %v526 = vlog2.pop %v446
    %v527 = vmul.f32 %v526, 0.6931472
    %v528 = vlog2.pop %v447
    %v529 = vmul.f32 %v528, 0.6931472
    %v530 = vlog2.pop %v448
    %v531 = vmul.f32 %v530, 0.6931472
    %v532 = vlog2.pop %v449
    %v533 = vmul.f32 %v532, 0.6931472
    %v534 = vlog2.pop %v450
    %v535 = vmul.f32 %v534, 0.6931472
    %v536 = vlog2.pop %v451
    %v537 = vmul.f32 %v536, 0.6931472
    %v538 = vlog2.pop %v452
    %v539 = vmul.f32 %v538, 0.6931472
    %v540 = vlog2.pop %v453
    %v541 = vmul.f32 %v540, 0.6931472
    %v542 = vsub.f32 %v446, 0.5
    %v543 = vsub.f32 %v447, 0.5
    %v544 = vsub.f32 %v448, 0.5
    %v545 = vsub.f32 %v449, 0.5
    %v546 = vsub.f32 %v450, 0.5
    %v547 = vsub.f32 %v451, 0.5
    %v548 = vsub.f32 %v452, 0.5
    %v549 = vsub.f32 %v453, 0.5
    %v550 = vmul.f32 %v542, %v527
    %v551 = vmul.f32 %v543, %v529
    %v552 = vmul.f32 %v544, %v531
    %v553 = vmul.f32 %v545, %v533
    %v554 = vmul.f32 %v546, %v535
    %v555 = vmul.f32 %v547, %v537
    %v556 = vmul.f32 %v548, %v539
    %v557 = vmul.f32 %v549, %v541
    %v558 = vsub.f32 %v550, %v446
    %v559 = vsub.f32 %v551, %v447
    %v560 = vsub.f32 %v552, %v448
    %v561 = vsub.f32 %v553, %v449
    %v562 = vsub.f32 %v554, %v450
    %v563 = vsub.f32 %v555, %v451
    %v564 = vsub.f32 %v556, %v452
    %v565 = vsub.f32 %v557, %v453
    %v566 = vadd.f32 %v558, 0.9189385
    %v567 = vadd.f32 %v559, 0.9189385
    %v568 = vadd.f32 %v560, 0.9189385
    %v569 = vadd.f32 %v561, 0.9189385
    %v570 = vadd.f32 %v562, 0.9189385
    %v571 = vadd.f32 %v563, 0.9189385
    %v572 = vadd.f32 %v564, 0.9189385
    %v573 = vadd.f32 %v565, 0.9189385
    %v574 = vmul.f32 %v518, 0.0007936508
    %v575 = vmul.f32 %v519, 0.0007936508
    %v576 = vmul.f32 %v520, 0.0007936508
    %v577 = vmul.f32 %v521, 0.0007936508
    %v578 = vmul.f32 %v522, 0.0007936508
    %v579 = vmul.f32 %v523, 0.0007936508
    %v580 = vmul.f32 %v524, 0.0007936508
    %v581 = vmul.f32 %v525, 0.0007936508
    %v582 = vadd.f32 %v574, -0.0027777778
    %v583 = vadd.f32 %v575, -0.0027777778
    %v584 = vadd.f32 %v576, -0.0027777778
    %v585 = vadd.f32 %v577, -0.0027777778
    %v586 = vadd.f32 %v578, -0.0027777778
    %v587 = vadd.f32 %v579, -0.0027777778
    %v588 = vadd.f32 %v580, -0.0027777778
    %v589 = vadd.f32 %v581, -0.0027777778
    %v590 = vmul.f32 %v518, %v582
    %v591 = vmul.f32 %v519, %v583
    %v592 = vmul.f32 %v520, %v584
    %v593 = vmul.f32 %v521, %v585
    %v594 = vmul.f32 %v522, %v586
    %v595 = vmul.f32 %v523, %v587
    %v596 = vmul.f32 %v524, %v588
    %v597 = vmul.f32 %v525, %v589
    %v598 = vadd.f32 %v590, 0.083333336
    %v599 = vadd.f32 %v591, 0.083333336
    %v600 = vadd.f32 %v592, 0.083333336
    %v601 = vadd.f32 %v593, 0.083333336
    %v602 = vadd.f32 %v594, 0.083333336
    %v603 = vadd.f32 %v595, 0.083333336
    %v604 = vadd.f32 %v596, 0.083333336
    %v605 = vadd.f32 %v597, 0.083333336
    %v606 = vmul.f32 %v494, %v598
    %v607 = vmul.f32 %v495, %v599
    %v608 = vmul.f32 %v496, %v600
    %v609 = vmul.f32 %v497, %v601
    %v610 = vmul.f32 %v498, %v602
    %v611 = vmul.f32 %v499, %v603
    %v612 = vmul.f32 %v500, %v604
    %v613 = vmul.f32 %v501, %v605
    %v614 = vadd.f32 %v566, %v606
    %v615 = vadd.f32 %v567, %v607
    %v616 = vadd.f32 %v568, %v608
    %v617 = vadd.f32 %v569, %v609
    %v618 = vadd.f32 %v570, %v610
    %v619 = vadd.f32 %v571, %v611
    %v620 = vadd.f32 %v572, %v612
    %v621 = vadd.f32 %v573, %v613
    %v622 = vmul.f32 %v494, 0.5
    %v623 = vmul.f32 %v495, 0.5
    %v624 = vmul.f32 %v496, 0.5
    %v625 = vmul.f32 %v497, 0.5
    %v626 = vmul.f32 %v498, 0.5
    %v627 = vmul.f32 %v499, 0.5
    %v628 = vmul.f32 %v500, 0.5
    %v629 = vmul.f32 %v501, 0.5
    %v630 = vsub.f32 %v527, %v622
    %v631 = vsub.f32 %v529, %v623
    %v632 = vsub.f32 %v531, %v624
    %v633 = vsub.f32 %v533, %v625
    %v634 = vsub.f32 %v535, %v626
    %v635 = vsub.f32 %v537, %v627
    %v636 = vsub.f32 %v539, %v628
    %v637 = vsub.f32 %v541, %v629
    %v638 = vmul.f32 %v518, 0.003968254
    %v639 = vmul.f32 %v519, 0.003968254
    %v640 = vmul.f32 %v520, 0.003968254
    %v641 = vmul.f32 %v521, 0.003968254
    %v642 = vmul.f32 %v522, 0.003968254
    %v643 = vmul.f32 %v523, 0.003968254
    %v644 = vmul.f32 %v524, 0.003968254
    %v645 = vmul.f32 %v525, 0.003968254
    %v646 = vsub.f32 0.008333334, %v638
    %v647 = vsub.f32 0.008333334, %v639
    %v648 = vsub.f32 0.008333334, %v640
    %v649 = vsub.f32 0.008333334, %v641
    %v650 = vsub.f32 0.008333334, %v642
    %v651 = vsub.f32 0.008333334, %v643
    %v652 = vsub.f32 0.008333334, %v644
    %v653 = vsub.f32 0.008333334, %v645
    %v654 = vmul.f32 %v518, %v646
    %v655 = vmul.f32 %v519, %v647
    %v656 = vmul.f32 %v520, %v648
    %v657 = vmul.f32 %v521, %v649
    %v658 = vmul.f32 %v522, %v650
    %v659 = vmul.f32 %v523, %v651
    %v660 = vmul.f32 %v524, %v652
    %v661 = vmul.f32 %v525, %v653
    %v662 = vsub.f32 0.083333336, %v654
    %v663 = vsub.f32 0.083333336, %v655
    %v664 = vsub.f32 0.083333336, %v656
    %v665 = vsub.f32 0.083333336, %v657
    %v666 = vsub.f32 0.083333336, %v658
    %v667 = vsub.f32 0.083333336, %v659
    %v668 = vsub.f32 0.083333336, %v660
    %v669 = vsub.f32 0.083333336, %v661
    %v670 = vmul.f32 %v518, %v662
    %v671 = vmul.f32 %v519, %v663
    %v672 = vmul.f32 %v520, %v664
    %v673 = vmul.f32 %v521, %v665
    %v674 = vmul.f32 %v522, %v666
    %v675 = vmul.f32 %v523, %v667
    %v676 = vmul.f32 %v524, %v668
    %v677 = vmul.f32 %v525, %v669
    %v678 = vsub.f32 %v630, %v670
    %v679 = vsub.f32 %v631, %v671
    %v680 = vsub.f32 %v632, %v672
    %v681 = vsub.f32 %v633, %v673
    %v682 = vsub.f32 %v634, %v674
    %v683 = vsub.f32 %v635, %v675
    %v684 = vsub.f32 %v636, %v676
    %v685 = vsub.f32 %v637, %v677
    %v686 = vlog2.pop %v438
    %v687 = vmul.f32 %v686, 0.6931472
    %v688 = vlog2.pop %v439
    %v689 = vmul.f32 %v688, 0.6931472
    %v690 = vlog2.pop %v440
    %v691 = vmul.f32 %v690, 0.6931472
    %v692 = vlog2.pop %v441
    %v693 = vmul.f32 %v692, 0.6931472
    %v694 = vlog2.pop %v442
    %v695 = vmul.f32 %v694, 0.6931472
    %v696 = vlog2.pop %v443
    %v697 = vmul.f32 %v696, 0.6931472
    %v698 = vlog2.pop %v444
    %v699 = vmul.f32 %v698, 0.6931472
    %v700 = vlog2.pop %v445
    %v701 = vmul.f32 %v700, 0.6931472
    %v702 = vsub.f32 %v614, %v687
    %v703 = vsub.f32 %v615, %v689
    %v704 = vsub.f32 %v616, %v691
    %v705 = vsub.f32 %v617, %v693
    %v706 = vsub.f32 %v618, %v695
    %v707 = vsub.f32 %v619, %v697
    %v708 = vsub.f32 %v620, %v699
    %v709 = vsub.f32 %v621, %v701
    %v710 = vsub.f32 %v678, %v510
    %v711 = vsub.f32 %v679, %v511
    %v712 = vsub.f32 %v680, %v512
    %v713 = vsub.f32 %v681, %v513
    %v714 = vsub.f32 %v682, %v514
    %v715 = vsub.f32 %v683, %v515
    %v716 = vsub.f32 %v684, %v516
    %v717 = vsub.f32 %v685, %v517
    %v718 = vsel %vm123, %v706, 0.0
    %v719 = vadd.f32 %v702, %v718
    %v720 = vrot.slane %v719, 4
    %v721 = vadd.f32 %v719, %v720
    %v722 = vrot.slane %v721, 2
    %v723 = vadd.f32 %v721, %v722
    %v724 = vrot.slane %v723, 1
    %v725 = vadd.f32 %v723, %v724
    %v726 = vsel %vm123, %v707, 0.0
    %v727 = vadd.f32 %v703, %v726
    %v728 = vrot.slane %v727, 4
    %v729 = vadd.f32 %v727, %v728
    %v730 = vrot.slane %v729, 2
    %v731 = vadd.f32 %v729, %v730
    %v732 = vrot.slane %v731, 1
    %v733 = vadd.f32 %v731, %v732
    %v734 = vsel %vm123, %v708, 0.0
    %v735 = vadd.f32 %v704, %v734
    %v736 = vrot.slane %v735, 4
    %v737 = vadd.f32 %v735, %v736
    %v738 = vrot.slane %v737, 2
    %v739 = vadd.f32 %v737, %v738
    %v740 = vrot.slane %v739, 1
    %v741 = vadd.f32 %v739, %v740
    %v742 = vsel %vm123, %v709, 0.0
    %v743 = vadd.f32 %v705, %v742
    %v744 = vrot.slane %v743, 4
    %v745 = vadd.f32 %v743, %v744
    %v746 = vrot.slane %v745, 2
    %v747 = vadd.f32 %v745, %v746
    %v748 = vrot.slane %v747, 1
    %v749 = vadd.f32 %v747, %v748
    %v750 = vsub.f32 %v374, %v725
    %v751 = vsub.f32 %v375, %v733
    %v752 = vsub.f32 %v376, %v741
    %v753 = vsub.f32 %v377, %v749
    %755 = vset.pattern.permute.xlu0 0
    %756 = vperm.xlu0 %755, %v61
    %v757 = vpop.permute.xlu0 %756
    %760 = vset.pattern.permute.xlu0 0
    %761 = vperm.xlu0 %760, %v62
    %v762 = vpop.permute.xlu0 %761
    %v764 = vsub.f32 %v196, %v757
    %v765 = vsub.f32 %v197, %v757
    %v766 = vsub.f32 %v198, %v757
    %v767 = vsub.f32 %v199, %v757
    %v768 = vsub.f32 %v200, %v762
    %v769 = vsub.f32 %v201, %v762
    %v770 = vsub.f32 %v202, %v762
    %v771 = vsub.f32 %v203, %v762
    %v772 = vmul.f32 %v764, %v710
    %v773 = vmul.f32 %v765, %v711
    %v774 = vmul.f32 %v766, %v712
    %v775 = vmul.f32 %v767, %v713
    %v776 = vmul.f32 %v768, %v714
    %v777 = vmul.f32 %v769, %v715
    %v778 = vmul.f32 %v770, %v716
    %v779 = vmul.f32 %v771, %v717
    %v780 = vsel %vm123, %v776, 0.0
    %v781 = vadd.f32 %v772, %v780
    %v782 = vrot.slane %v781, 4
    %v783 = vadd.f32 %v781, %v782
    %v784 = vrot.slane %v783, 2
    %v785 = vadd.f32 %v783, %v784
    %v786 = vrot.slane %v785, 1
    %v787 = vadd.f32 %v785, %v786
    %v788 = vsel %vm123, %v777, 0.0
    %v789 = vadd.f32 %v773, %v788
    %v790 = vrot.slane %v789, 4
    %v791 = vadd.f32 %v789, %v790
    %v792 = vrot.slane %v791, 2
    %v793 = vadd.f32 %v791, %v792
    %v794 = vrot.slane %v793, 1
    %v795 = vadd.f32 %v793, %v794
    %v796 = vsel %vm123, %v778, 0.0
    %v797 = vadd.f32 %v774, %v796
    %v798 = vrot.slane %v797, 4
    %v799 = vadd.f32 %v797, %v798
    %v800 = vrot.slane %v799, 2
    %v801 = vadd.f32 %v799, %v800
    %v802 = vrot.slane %v801, 1
    %v803 = vadd.f32 %v801, %v802
    %v804 = vsel %vm123, %v779, 0.0
    %v805 = vadd.f32 %v775, %v804
    %v806 = vrot.slane %v805, 4
    %v807 = vadd.f32 %v805, %v806
    %v808 = vrot.slane %v807, 2
    %v809 = vadd.f32 %v807, %v808
    %v810 = vrot.slane %v809, 1
    %v811 = vadd.f32 %v809, %v810
    %813 = vset.pattern.permute.xlu0 0
    %814 = vperm.xlu0 %813, %v73
    %v815 = vpop.permute.xlu0 %814
    %v817 = vsub.f32 %v208, %v815
    %v818 = vsub.f32 %v209, %v815
    %v819 = vsub.f32 %v210, %v815
    %v820 = vsub.f32 %v211, %v815
    %v821 = vmul.f32 %v378, %v817
    %v822 = vmul.f32 %v379, %v818
    %v823 = vmul.f32 %v380, %v819
    %v824 = vmul.f32 %v381, %v820
    %v825 = vsub.f32 %v787, %v821
    %v826 = vsub.f32 %v795, %v822
    %v827 = vsub.f32 %v803, %v823
    %v828 = vsub.f32 %v811, %v824
    %v829 = vadd.f32 %v750, %v825
    %v830 = vadd.f32 %v751, %v826
    %v831 = vadd.f32 %v752, %v827
    %v832 = vadd.f32 %v753, %v828
    %v833 = vstv %s55
    %v834 = vadd.s32 %v78, %v833
    %v835 = vadd.s32 %v79, %v833
    %v836 = vadd.s32 %v80, %v833
    %v837 = vadd.s32 %v81, %v833
    %vm838 = vcmp.lt.s32.totalorder %v834, 8
    %vm839 = vcmp.lt.s32.totalorder %v835, 8
    %vm840 = vcmp.lt.s32.totalorder %v836, 8
    %vm841 = vcmp.lt.s32.totalorder %v837, 8
    %v842 = vsel %vm838, %v394, 0.0
    %v843 = vsel %vm839, %v395, 0.0
    %v844 = vsel %vm840, %v396, 0.0
    %v845 = vsel %vm841, %v397, 0.0
    %v846 = vadd.f32 %v842, 0.0
    %v847 = vadd.f32 %v843, 0.0
    %v848 = vadd.f32 %v844, 0.0
    %v849 = vadd.f32 %v845, 0.0
    %v850 = vsel %vm838, %v829, 0.0
    %v851 = vsel %vm839, %v830, 0.0
    %v852 = vsel %vm840, %v831, 0.0
    %v853 = vsel %vm841, %v832, 0.0
    %v854 = vadd.f32 %v850, 0.0
    %v855 = vadd.f32 %v851, 0.0
    %v856 = vadd.f32 %v852, 0.0
    %v857 = vadd.f32 %v853, 0.0
    %v858 = vadd.f32 %v846, %v847
    %v859 = vadd.f32 %v854, %v855
    %v860 = vadd.f32 %v858, %v848
    %v861 = vadd.f32 %v859, %v856
    %v862 = vadd.f32 %v860, %v849
    %v863 = vadd.f32 %v861, %v857
    %v864 = vld [vmem:[#allocation5] sm:$0x1]
    %v865 = vadd.f32 %v864, %v862
    %866 = vst [vmem:[#allocation5] sm:$0x1] %v865
    %v867 = vld [vmem:[#allocation5 + $0x1] sm:$0x1]
    %v869 = vrot.slane %v863, 2
    %v871 = vadd.f32 %v867, %v869
    %872 = vst [vmem:[#allocation5 + $0x1] sm:$0x1] %v871
    // Predicated region
    $region22: #{tpu_custom_call.1} parent=1 // pred_check
      _
    $region23: #{tpu_custom_call.1} parent=1 // pred_check_branch
      %874 = sbr.rel (0) target = $region25
    $region24: #{tpu_custom_call.1} parent=1 // pred_region
      %s876 = ssub.s32 32, 32
      %877 = vsyncadd [#allocation4], %s876
      %s879 = sshll.u32 [#allocation5], 4
      %s880 = int_to_ptr.vmem [resolvable:$true] %s879
      %882 = dma.vmem_to_hbm [thread:$0]  %s880, 32, %s3, [#allocation4]
    $region25: #{tpu_custom_call.1} parent=1 // pred_fallthru
      _
    // Predicated region
    $region26: #{tpu_custom_call.1} parent=1 // pred_check
      _
    $region27: #{tpu_custom_call.1} parent=1 // pred_check_branch
      %884 = sbr.rel (0) target = $region29
    $region28: #{tpu_custom_call.1} parent=1 // pred_region
      %885 = dma.done [#allocation4], 32
    $region29: #{tpu_custom_call.1} parent=1 // pred_fallthru
      _
    %886 = vsyncpa [#allocation3], 1
    %887 = vsyncpa [#allocation4], 1

</llo_original>
